<compile_context>
chip_gen: v6e
topology: v6e:2x2x1
jax: 0.10.0
libtpu: 0.0.40
codegen_flags: <defaults>
</compile_context>

<pallas_src>
import functools

import jax
import jax.numpy as jnp
from jax import lax
from jax.experimental import pallas as pl
from jax.experimental.pallas import tpu as pltpu

ALPHA = 0.8
BETA = 0.2
EPS = 1e-6
LANE = 128


def _cdiv(a, b):
    return -(-a // b)


def _loss_kernel(x_ref, y_ref, part_ref, *, tile_rows, inner_rows):
    # part_ref block: (4, 8, LANE), resident across the sequential step axis.
    s = pl.program_id(1)

    @pl.when(s == 0)
    def _():
        part_ref[...] = jnp.zeros_like(part_ref)

    n_inner = tile_rows // inner_rows
    zero = jnp.zeros((8, LANE), jnp.float32)

    def fold(v):
        # (inner_rows, LANE) -> (8, LANE): pure vreg adds (no cross-lane work).
        if inner_rows == 8:
            return v
        return jnp.sum(v.reshape(inner_rows // 8, 8, LANE), axis=0)

    def body(i, carry):
        acc_bce, acc_p, acc_y, acc_int = carry
        off = pl.multiple_of(i * inner_rows, inner_rows)
        x = x_ref[pl.ds(off, inner_rows), :].astype(jnp.float32)
        y = y_ref[pl.ds(off, inner_rows), :].astype(jnp.float32)
        # Shared exp: e = exp(-|x|) feeds both the stable BCE term and sigmoid.
        e = jnp.exp(-jnp.abs(x))
        # torch.nn.BCEWithLogitsLoss (stable): max(x,0) - x*y + log(1 + exp(-|x|))
        bce = jnp.maximum(x, 0.0) - x * y + jnp.log1p(e)
        # sigmoid(x) = 1/(1+e) if x>=0 else e/(1+e); approx EUP reciprocal
        # instead of a full-precision VALU divide.
        r = pl.reciprocal(1.0 + e, approx=True)
        p = jnp.where(x >= 0, r, e * r)
        return (acc_bce + fold(bce),
                acc_p + fold(p),
                acc_y + fold(y),
                acc_int + fold(p * y))

    acc_bce, acc_p, acc_y, acc_int = lax.fori_loop(
        0, n_inner, body, (zero, zero, zero, zero),
        unroll=min(8, max(n_inner, 1)))

    part_ref[0] += acc_bce    # sum of elementwise BCE-with-logits
    part_ref[1] += acc_p      # sum of sigmoid(pred)
    part_ref[2] += acc_y      # sum of target
    part_ref[3] += acc_int    # sum of sigmoid(pred) * target


def _tail_sums(x, y):
    # Plain-JAX reduction for the < 1-tile remainder (and tiny inputs).
    x = x.astype(jnp.float32)
    y = y.astype(jnp.float32)
    e = jnp.exp(-jnp.abs(x))
    bce = jnp.maximum(x, 0.0) - x * y + jnp.log1p(e)
    p = jnp.where(x >= 0, 1.0, e) / (1.0 + e)
    return jnp.sum(bce), jnp.sum(p), jnp.sum(y), jnp.sum(p * y)


def loss_used(pred, gt, *, alpha=ALPHA, beta=BETA, eps=EPS,
              tile_rows=4096, num_chunks=1, use_core_parallel=False):
    """alpha * BCEWithLogitsLoss(pred, gt) + beta * CEL(pred, gt).

    v7x: pass num_chunks=2, use_core_parallel=True to engage both TensorCores.
    """
    assert pred.shape == gt.shape
    total = int(pred.size)
    assert total > 0

    x_flat = pred.reshape(-1)
    y_flat = gt.reshape(-1)

    itemsize = jnp.dtype(pred.dtype).itemsize
    sub = 8 if itemsize >= 4 else 16          # min sublane granularity (f32 / bf16)

    rows = total // LANE                      # complete 128-lane rows
    rows_per_chunk = rows // num_chunks
    t_req = max(sub, _cdiv(int(tile_rows), sub) * sub)

    if rows_per_chunk >= sub:
        steps = _cdiv(rows_per_chunk, t_req)
        t = max(sub, (rows_per_chunk // steps // sub) * sub)
    else:
        steps, t = 0, sub                     # too small for even one tile

    bulk_rows = num_chunks * steps * t
    bulk_elems = bulk_rows * LANE

    if steps > 0:
        # Metadata-only reshape when total % 128 == 0 (the common NCHW case);
        # otherwise XLA copies the 128-aligned prefix once (lane remainder only).
        aligned = rows * LANE
        x2 = x_flat[:aligned].reshape(rows, LANE)
        y2 = y_flat[:aligned].reshape(rows, LANE)

        kernel = functools.partial(_loss_kernel, tile_rows=t, inner_rows=sub)

        chunk_sem = (pltpu.CORE_PARALLEL
                     if (use_core_parallel and num_chunks > 1)
                     else pltpu.ARBITRARY)

        partials = pl.pallas_call(
            kernel,
            out_shape=jax.ShapeDtypeStruct((num_chunks, 4, 8, LANE), jnp.float32),
            grid_spec=pltpu.PrefetchScalarGridSpec(
                num_scalar_prefetch=0,
                grid=(num_chunks, steps),
                in_specs=[
                    pl.BlockSpec((t, LANE), lambda c, s: (c * steps + s, 0)),
                    pl.BlockSpec((t, LANE), lambda c, s: (c * steps + s, 0)),
                ],
                out_specs=pl.BlockSpec((None, 4, 8, LANE),
                                       lambda c, s: (c, 0, 0, 0)),
            ),
            compiler_params=pltpu.CompilerParams(
                dimension_semantics=(chunk_sem, pltpu.ARBITRARY),
                vmem_limit_bytes=48 * 1024 * 1024,
            ),
            # If an xprof trace shows exposed DMA at step boundaries, add
            # pipeline_mode=pl.Buffered(3) to the two input BlockSpecs.
        )(x2, y2)

        sums = jnp.sum(partials, axis=(0, 2, 3))   # tiny final combine
        bce_sum, p_sum, y_sum, inter_sum = sums[0], sums[1], sums[2], sums[3]
    else:
        bce_sum = p_sum = y_sum = inter_sum = jnp.float32(0.0)

    if bulk_elems < total:
        tb, tp, ty, ti = _tail_sums(x_flat[bulk_elems:], y_flat[bulk_elems:])
        bce_sum = bce_sum + tb
        p_sum = p_sum + tp
        y_sum = y_sum + ty
        inter_sum = inter_sum + ti

    bce_mean = bce_sum / total
    numerator = (p_sum - inter_sum) + (y_sum - inter_sum)
    cel = numerator / (p_sum + y_sum + eps)
    return alpha * bce_mean + beta * cel


def _reference(pred, gt, alpha=ALPHA, beta=BETA, eps=EPS):
    x = pred.astype(jnp.float32)
    y = gt.astype(jnp.float32)
    bce = jnp.mean(jnp.maximum(x, 0.0) - x * y + jnp.log1p(jnp.exp(-jnp.abs(x))))
    p = jax.nn.sigmoid(x)
    inter = p * y
    numerator = jnp.sum(p - inter) + jnp.sum(y - inter)
    denominator = jnp.sum(p) + jnp.sum(y)
    cel = numerator / (denominator + eps)
    return alpha * bce + beta * cel


if __name__ == "__main__":
    key = jax.random.PRNGKey(0)
    k1, k2 = jax.random.split(key)
    # NCHW inputs, as the PyTorch module would receive.
    pred = jax.random.normal(k1, (2, 4, 16, 16), dtype=jnp.float32)   # logits
    gt = jax.random.uniform(k2, (2, 4, 16, 16), dtype=jnp.float32)    # targets in [0, 1]

    loss = loss_used(pred, gt)
    jax.block_until_ready(loss)
    assert jnp.allclose(loss, _reference(pred, gt), rtol=2e-3, atol=2e-3), loss

    # Exercise the multi-step accumulation path.
    k3, k4 = jax.random.split(k2)
    p2 = jax.random.normal(k3, (2, 4, 64, 64), dtype=jnp.float32)
    g2 = jax.random.uniform(k4, (2, 4, 64, 64), dtype=jnp.float32)
    l2 = loss_used(p2, g2, tile_rows=64)
    jax.block_until_ready(l2)
    assert jnp.allclose(l2, _reference(p2, g2), rtol=2e-3, atol=2e-3), l2

    # Exercise the lane-unaligned / plain-JAX tail path.
    p3 = jax.random.normal(k1, (3, 5, 7, 11), dtype=jnp.float32)
    g3 = jax.random.uniform(k2, (3, 5, 7, 11), dtype=jnp.float32)
    l3 = loss_used(p3, g3)
    jax.block_until_ready(l3)
    assert jnp.allclose(l3, _reference(p3, g3), rtol=2e-3, atol=2e-3), l3

    print("KERNEL_OK")
</pallas_src>

<mosaic_0001>
module attributes {stable_mosaic.version = 11 : i64} {
  func.func @_loss_kernel(%arg0: i32, %arg1: i32, %arg2: memref<16x128xf32, #tpu.memory_space<vmem>>, %arg3: memref<16x128xf32, #tpu.memory_space<vmem>>, %arg4: memref<1x4x8x128xf32, #tpu.memory_space<vmem>>) attributes {dimension_semantics = [#tpu.dimension_semantics<arbitrary>, #tpu.dimension_semantics<arbitrary>], iteration_bounds = array<i64: 1, 1>, scalar_prefetch = 0 : i64, scratch_operands = 0 : i64, tpu.core_type = #tpu.core_type<tc>, window_params = [{transform_indices = @transform_0, window_bounds = array<i64: 16, 128>}, {transform_indices = @transform_1, window_bounds = array<i64: 16, 128>}, {transform_indices = @transform_2, window_bounds = array<i64: 1, 4, 8, 128>}]} {
    %c0_i32 = arith.constant 0 : i32
    %0 = arith.cmpi eq, %arg1, %c0_i32 : i32
    %1 = arith.extui %0 : i1 to i32
    %c0_i32_0 = arith.constant 0 : i32
    %2 = arith.cmpi ne, %1, %c0_i32_0 : i32
    scf.if %2 {
      %cst_43 = arith.constant 0.000000e+00 : f32
      %84 = vector.broadcast %cst_43 : f32 to vector<4x8x128xf32>
      %c0_44 = arith.constant 0 : index
      %c0_45 = arith.constant 0 : index
      %c0_46 = arith.constant 0 : index
      %c0_47 = arith.constant 0 : index
      %85 = vector.load %arg4[%c0_44, %c0_45, %c0_46, %c0_47] : memref<1x4x8x128xf32, #tpu.memory_space<vmem>>, vector<1x4x8x128xf32>
      %86 = vector.shape_cast %85 : vector<1x4x8x128xf32> to vector<4x8x128xf32>
      %87 = vector.shape_cast %84 : vector<4x8x128xf32> to vector<1x4x8x128xf32>
      tpu.vector_store %arg4[%c0_44, %c0_45, %c0_46, %c0_47], %87 {strides = array<i32>} : memref<1x4x8x128xf32, #tpu.memory_space<vmem>>, vector<1x4x8x128xf32>,
    } else {
    }
    %cst = arith.constant 0.000000e+00 : f32
    %3 = vector.broadcast %cst : f32 to vector<8x128xf32>
    %c0_i32_1 = arith.constant 0 : i32
    %c8_i32 = arith.constant 8 : i32
    %4 = arith.muli %c0_i32_1, %c8_i32 : i32
    %5 = tpu.assume_multiple %4, 8 : i32
    %6 = arith.index_cast %5 : i32 to index
    %c0 = arith.constant 0 : index
    %7 = vector.load %arg2[%6, %c0] : memref<16x128xf32, #tpu.memory_space<vmem>>, vector<8x128xf32>
    %8 = arith.index_cast %5 : i32 to index
    %c0_2 = arith.constant 0 : index
    %9 = vector.load %arg3[%8, %c0_2] : memref<16x128xf32, #tpu.memory_space<vmem>>, vector<8x128xf32>
    %10 = math.absf %7 : vector<8x128xf32>
    %cst_3 = arith.constant 0.000000e+00 : f32
    %11 = vector.broadcast %cst_3 : f32 to vector<8x128xf32>
    %12 = arith.subf %11, %10 : vector<8x128xf32>
    %13 = math.exp %12 : vector<8x128xf32>
    %cst_4 = arith.constant 0.000000e+00 : f32
    %14 = vector.broadcast %cst_4 : f32 to vector<8x128xf32>
    %15 = arith.maximumf %7, %14 : vector<8x128xf32>
    %16 = arith.mulf %7, %9 : vector<8x128xf32>
    %17 = arith.subf %15, %16 : vector<8x128xf32>
    %18 = math.log1p %13 : vector<8x128xf32>
    %19 = arith.addf %17, %18 : vector<8x128xf32>
    %cst_5 = arith.constant 1.000000e+00 : f32
    %20 = vector.broadcast %cst_5 : f32 to vector<8x128xf32>
    %21 = arith.addf %20, %13 : vector<8x128xf32>
    %22 = tpu.reciprocal %21 {approx = true} : vector<8x128xf32> -> vector<8x128xf32>
    %cst_6 = arith.constant 0.000000e+00 : f32
    %23 = vector.broadcast %cst_6 : f32 to vector<8x128xf32>
    %24 = arith.cmpf oge, %7, %23 : vector<8x128xf32>
    %25 = arith.mulf %13, %22 : vector<8x128xf32>
    %26 = arith.select %24, %22, %25 : vector<8x128xi1>, vector<8x128xf32>
    %27 = arith.addf %3, %19 : vector<8x128xf32>
    %28 = arith.addf %3, %26 : vector<8x128xf32>
    %29 = arith.addf %3, %9 : vector<8x128xf32>
    %30 = arith.mulf %26, %9 : vector<8x128xf32>
    %31 = arith.addf %3, %30 : vector<8x128xf32>
    %c1_i32 = arith.constant 1 : i32
    %c8_i32_7 = arith.constant 8 : i32
    %32 = arith.muli %c1_i32, %c8_i32_7 : i32
    %33 = tpu.assume_multiple %32, 8 : i32
    %34 = arith.index_cast %33 : i32 to index
    %c0_8 = arith.constant 0 : index
    %35 = vector.load %arg2[%34, %c0_8] : memref<16x128xf32, #tpu.memory_space<vmem>>, vector<8x128xf32>
    %36 = arith.index_cast %33 : i32 to index
    %c0_9 = arith.constant 0 : index
    %37 = vector.load %arg3[%36, %c0_9] : memref<16x128xf32, #tpu.memory_space<vmem>>, vector<8x128xf32>
    %38 = math.absf %35 : vector<8x128xf32>
    %cst_10 = arith.constant 0.000000e+00 : f32
    %39 = vector.broadcast %cst_10 : f32 to vector<8x128xf32>
    %40 = arith.subf %39, %38 : vector<8x128xf32>
    %41 = math.exp %40 : vector<8x128xf32>
    %cst_11 = arith.constant 0.000000e+00 : f32
    %42 = vector.broadcast %cst_11 : f32 to vector<8x128xf32>
    %43 = arith.maximumf %35, %42 : vector<8x128xf32>
    %44 = arith.mulf %35, %37 : vector<8x128xf32>
    %45 = arith.subf %43, %44 : vector<8x128xf32>
    %46 = math.log1p %41 : vector<8x128xf32>
    %47 = arith.addf %45, %46 : vector<8x128xf32>
    %cst_12 = arith.constant 1.000000e+00 : f32
    %48 = vector.broadcast %cst_12 : f32 to vector<8x128xf32>
    %49 = arith.addf %48, %41 : vector<8x128xf32>
    %50 = tpu.reciprocal %49 {approx = true} : vector<8x128xf32> -> vector<8x128xf32>
    %cst_13 = arith.constant 0.000000e+00 : f32
    %51 = vector.broadcast %cst_13 : f32 to vector<8x128xf32>
    %52 = arith.cmpf oge, %35, %51 : vector<8x128xf32>
    %53 = arith.mulf %41, %50 : vector<8x128xf32>
    %54 = arith.select %52, %50, %53 : vector<8x128xi1>, vector<8x128xf32>
    %55 = arith.addf %27, %47 : vector<8x128xf32>
    %56 = arith.addf %28, %54 : vector<8x128xf32>
    %57 = arith.addf %29, %37 : vector<8x128xf32>
    %58 = arith.mulf %54, %37 : vector<8x128xf32>
    %59 = arith.addf %31, %58 : vector<8x128xf32>
    %c2_i32 = arith.constant 2 : i32
    %c0_14 = arith.constant 0 : index
    %c0_15 = arith.constant 0 : index
    %c0_16 = arith.constant 0 : index
    %c0_17 = arith.constant 0 : index
    %60 = vector.load %arg4[%c0_14, %c0_15, %c0_16, %c0_17] : memref<1x4x8x128xf32, #tpu.memory_space<vmem>>, vector<1x1x8x128xf32>
    %61 = vector.shape_cast %60 : vector<1x1x8x128xf32> to vector<8x128xf32>
    %62 = arith.addf %61, %55 : vector<8x128xf32>
    %c0_18 = arith.constant 0 : index
    %c0_19 = arith.constant 0 : index
    %c0_20 = arith.constant 0 : index
    %c0_21 = arith.constant 0 : index
    %63 = vector.load %arg4[%c0_18, %c0_19, %c0_20, %c0_21] : memref<1x4x8x128xf32, #tpu.memory_space<vmem>>, vector<1x1x8x128xf32>
    %64 = vector.shape_cast %63 : vector<1x1x8x128xf32> to vector<8x128xf32>
    %65 = vector.shape_cast %62 : vector<8x128xf32> to vector<1x1x8x128xf32>
    tpu.vector_store %arg4[%c0_18, %c0_19, %c0_20, %c0_21], %65 {strides = array<i32>} : memref<1x4x8x128xf32, #tpu.memory_space<vmem>>, vector<1x1x8x128xf32>,
    %c0_22 = arith.constant 0 : index
    %c1 = arith.constant 1 : index
    %c0_23 = arith.constant 0 : index
    %c0_24 = arith.constant 0 : index
    %66 = vector.load %arg4[%c0_22, %c1, %c0_23, %c0_24] : memref<1x4x8x128xf32, #tpu.memory_space<vmem>>, vector<1x1x8x128xf32>
    %67 = vector.shape_cast %66 : vector<1x1x8x128xf32> to vector<8x128xf32>
    %68 = arith.addf %67, %56 : vector<8x128xf32>
    %c0_25 = arith.constant 0 : index
    %c1_26 = arith.constant 1 : index
    %c0_27 = arith.constant 0 : index
    %c0_28 = arith.constant 0 : index
    %69 = vector.load %arg4[%c0_25, %c1_26, %c0_27, %c0_28] : memref<1x4x8x128xf32, #tpu.memory_space<vmem>>, vector<1x1x8x128xf32>
    %70 = vector.shape_cast %69 : vector<1x1x8x128xf32> to vector<8x128xf32>
    %71 = vector.shape_cast %68 : vector<8x128xf32> to vector<1x1x8x128xf32>
    tpu.vector_store %arg4[%c0_25, %c1_26, %c0_27, %c0_28], %71 {strides = array<i32>} : memref<1x4x8x128xf32, #tpu.memory_space<vmem>>, vector<1x1x8x128xf32>,
    %c0_29 = arith.constant 0 : index
    %c2 = arith.constant 2 : index
    %c0_30 = arith.constant 0 : index
    %c0_31 = arith.constant 0 : index
    %72 = vector.load %arg4[%c0_29, %c2, %c0_30, %c0_31] : memref<1x4x8x128xf32, #tpu.memory_space<vmem>>, vector<1x1x8x128xf32>
    %73 = vector.shape_cast %72 : vector<1x1x8x128xf32> to vector<8x128xf32>
    %74 = arith.addf %73, %57 : vector<8x128xf32>
    %c0_32 = arith.constant 0 : index
    %c2_33 = arith.constant 2 : index
    %c0_34 = arith.constant 0 : index
    %c0_35 = arith.constant 0 : index
    %75 = vector.load %arg4[%c0_32, %c2_33, %c0_34, %c0_35] : memref<1x4x8x128xf32, #tpu.memory_space<vmem>>, vector<1x1x8x128xf32>
    %76 = vector.shape_cast %75 : vector<1x1x8x128xf32> to vector<8x128xf32>
    %77 = vector.shape_cast %74 : vector<8x128xf32> to vector<1x1x8x128xf32>
    tpu.vector_store %arg4[%c0_32, %c2_33, %c0_34, %c0_35], %77 {strides = array<i32>} : memref<1x4x8x128xf32, #tpu.memory_space<vmem>>, vector<1x1x8x128xf32>,
    %c0_36 = arith.constant 0 : index
    %c3 = arith.constant 3 : index
    %c0_37 = arith.constant 0 : index
    %c0_38 = arith.constant 0 : index
    %78 = vector.load %arg4[%c0_36, %c3, %c0_37, %c0_38] : memref<1x4x8x128xf32, #tpu.memory_space<vmem>>, vector<1x1x8x128xf32>
    %79 = vector.shape_cast %78 : vector<1x1x8x128xf32> to vector<8x128xf32>
    %80 = arith.addf %79, %59 : vector<8x128xf32>
    %c0_39 = arith.constant 0 : index
    %c3_40 = arith.constant 3 : index
    %c0_41 = arith.constant 0 : index
    %c0_42 = arith.constant 0 : index
    %81 = vector.load %arg4[%c0_39, %c3_40, %c0_41, %c0_42] : memref<1x4x8x128xf32, #tpu.memory_space<vmem>>, vector<1x1x8x128xf32>
    %82 = vector.shape_cast %81 : vector<1x1x8x128xf32> to vector<8x128xf32>
    %83 = vector.shape_cast %80 : vector<8x128xf32> to vector<1x1x8x128xf32>
    tpu.vector_store %arg4[%c0_39, %c3_40, %c0_41, %c0_42], %83 {strides = array<i32>} : memref<1x4x8x128xf32, #tpu.memory_space<vmem>>, vector<1x1x8x128xf32>,
    return
  }
  func.func @transform_0(%arg0: i32, %arg1: i32) -> (i32, i32) {
    %c1_i32 = arith.constant 1 : i32
    %0 = arith.muli %arg0, %c1_i32 : i32
    %1 = arith.addi %0, %arg1 : i32
    %c0_i32 = arith.constant 0 : i32
    %c0_i32_0 = arith.constant 0 : i32
    return %1, %c0_i32 : i32, i32
  }
  func.func @transform_1(%arg0: i32, %arg1: i32) -> (i32, i32) {
    %c1_i32 = arith.constant 1 : i32
    %0 = arith.muli %arg0, %c1_i32 : i32
    %1 = arith.addi %0, %arg1 : i32
    %c0_i32 = arith.constant 0 : i32
    %c0_i32_0 = arith.constant 0 : i32
    return %1, %c0_i32 : i32, i32
  }
  func.func @transform_2(%arg0: i32, %arg1: i32) -> (i32, i32, i32, i32) {
    %c0_i32 = arith.constant 0 : i32
    %c0_i32_0 = arith.constant 0 : i32
    %c0_i32_1 = arith.constant 0 : i32
    %c0_i32_2 = arith.constant 0 : i32
    return %arg0, %c0_i32, %c0_i32_0, %c0_i32_1 : i32, i32, i32, i32
  }
}

</mosaic_0001>

<llo_original>
// kernel: tpu_custom_call.1
$region0: #{tpu_custom_call.1}
  #allocation0 [shape = 'u32[]', space=smem, size = 0x4, offset = 0x4, fixed_abs, tag = 'smem constant byte address 0x4 - core index']
  #allocation1 [shape = 'u32[144,128]{1,0:T(1,128)}', space=vmem, size = 0x12000, scoped, tag = 'internal scratch']
  %s0 = inlined_call_operand.hbm [shape: f32[16,128], index: 0, kind: input, shape index: {}]
  %s1 = inlined_call_operand.hbm [shape: f32[16,128], index: 1, kind: input, shape index: {}]
  %s2 = inlined_call_operand.hbm [shape: f32[1,4,8,128], index: 2, kind: output, shape index: {}]
  %s3 = sld [smem:[#allocation0]]
  $region30: #{tpu_custom_call.1} parent=0
    _
  %s5 = ssub.s32 1, %s3
  %s6 = scalar_select 0, %s5, %s3
  $region1: #{tpu_custom_call.1} parent=0
    #allocation2 [shape = 'u8[8192]{0}', space=vmem, size = 0x2000, scoped, tag = 'input window, operand 0, single buffered']
    #allocation3 [shape = 's32[1]{0}', space=sflag, size = 0x4, scoped, tag = 'scoped memory for tpu_custom_call.1']
    #allocation4 [shape = 's32[1]{0}', space=sflag, size = 0x4, scoped, tag = 'scoped memory for tpu_custom_call.1']
    #allocation5 [shape = 'u8[8192]{0}', space=vmem, size = 0x2000, scoped, tag = 'input window, operand 1, single buffered']
    #allocation6 [shape = 's32[1]{0}', space=sflag, size = 0x4, scoped, tag = 'scoped memory for tpu_custom_call.1']
    #allocation7 [shape = 'u8[16384]{0}', space=vmem, size = 0x4000, scoped, tag = 'output window, operand 0, single buffered']
    %7 = vsyncpa [#allocation3], 0
    %8 = vsyncpa [#allocation6], 0
    %9 = vsyncpa [#allocation4], 0
    // Predicated region
    $region2: #{tpu_custom_call.1} parent=1 // pred_check
      _
    $region3: #{tpu_custom_call.1} parent=1 // pred_check_branch
      %11 = sbr.rel (0) target = $region5
    $region4: #{tpu_custom_call.1} parent=1 // pred_region
      %s12 = sadd.s32 0, 0
      %s13 = smul.u32 2, %s12
      %s15 = ssub.s32 256, 256
      %16 = vsyncadd [#allocation3], %s15
      %s17 = smul.addr %s13, 128
      %s18 = scalar_lea.hbm %s0, %s17
      %s19 = sshll.u32 [#allocation2], 4
      %s20 = int_to_ptr.vmem [resolvable:$true] %s19
      %25 = dma.hbm_to_vmem [thread:$0]  %s18, 256, %s20, [#allocation3], 128, 128, 8
    $region5: #{tpu_custom_call.1} parent=1 // pred_fallthru
      _
    // Predicated region
    $region6: #{tpu_custom_call.1} parent=1 // pred_check
      _
    $region7: #{tpu_custom_call.1} parent=1 // pred_check_branch
      %27 = sbr.rel (0) target = $region9
    $region8: #{tpu_custom_call.1} parent=1 // pred_region
      %s28 = sadd.s32 0, 0
      %s29 = smul.u32 2, %s28
      %s31 = ssub.s32 256, 256
      %32 = vsyncadd [#allocation6], %s31
      %s33 = smul.addr %s29, 128
      %s34 = scalar_lea.hbm %s1, %s33
      %s35 = sshll.u32 [#allocation5], 4
      %s36 = int_to_ptr.vmem [resolvable:$true] %s35
      %41 = dma.hbm_to_vmem [thread:$0]  %s34, 256, %s36, [#allocation6], 128, 128, 8
    $region9: #{tpu_custom_call.1} parent=1 // pred_fallthru
      _
    // Predicated region
    $region10: #{tpu_custom_call.1} parent=1 // pred_check
      _
    $region11: #{tpu_custom_call.1} parent=1 // pred_check_branch
      %43 = sbr.rel (0) target = $region13
    $region12: #{tpu_custom_call.1} parent=1 // pred_region
      %44 = dma.done [#allocation3], 256
    $region13: #{tpu_custom_call.1} parent=1 // pred_fallthru
      _
    // Predicated region
    $region14: #{tpu_custom_call.1} parent=1 // pred_check
      _
    $region15: #{tpu_custom_call.1} parent=1 // pred_check_branch
      %46 = sbr.rel (0) target = $region17
    $region16: #{tpu_custom_call.1} parent=1 // pred_region
      %47 = dma.done [#allocation6], 256
    $region17: #{tpu_custom_call.1} parent=1 // pred_fallthru
      _
    %s48 = sadd.s32 0, 0
    %s49 = smul.u32 2, %s48
    %s50 = sadd.s32 0, 0
    %s51 = smul.u32 2, %s50
    %p52 = scmp.eq.s32.totalorder 0, 0
    // Predicated region
    $region18: #{tpu_custom_call.1} parent=1 // pred_check
      %p53 = pneg %p52
    $region19: #{tpu_custom_call.1} parent=1 // pred_check_branch
      %55 = sbr.rel (%p53) target = $region21
    $region20: #{tpu_custom_call.1} parent=1 // pred_region
      %56 = vst [vmem:[#allocation7] sm:$0xff] 0.0
      %57 = vst [vmem:[#allocation7 + $0x8] sm:$0xff] 0.0
      %58 = vst [vmem:[#allocation7 + $0x10] sm:$0xff] 0.0
      %59 = vst [vmem:[#allocation7 + $0x18] sm:$0xff] 0.0
    $region21: #{tpu_custom_call.1} parent=1 // pred_fallthru
      _
    %v60 = vld [vmem:[#allocation2] sm:$0xff]
    %v61 = vld [vmem:[#allocation5] sm:$0xff]
    %v62 = vand.u32 2147483647, %v60
    %v63 = vsub.f32 0.0, %v62
    %v64 = vmul.f32 %v63, 1.442695
    %v65 = vpow.pop %v64
    %v66 = vmax.f32 %v60, 0.0
    %v67 = vmul.f32 %v60, %v61
    %v68 = vsub.f32 %v66, %v67
    %v69 = vadd.f32 %v65, 1.0
    %v70 = vlog2.pop %v69
    %v71 = vmul.f32 %v70, 0.6931472
    %v72 = vmul.f32 -0.5, %v65
    %v73 = vadd.f32 %v72, 1.0
    %v74 = vmul.f32 %v73, %v65
    %v75 = vand.u32 2147483647, %v65
    %vm76 = vcmp.lt.f32.partialorder %v75, 0.0004427343
    %v77 = vsel %vm76, %v74, %v71
    %v78 = vadd.f32 %v68, %v77
    %v79 = vadd.f32 %v65, 1.0
    %v80 = vrcp.pop %v79
    %vm81 = vcmp.ge.f32.partialorder %v60, 0.0
    %v82 = vmul.f32 %v65, %v80
    %v83 = vsel %vm81, %v80, %v82
    %v84 = vadd.f32 %v78, 0.0
    %v85 = vadd.f32 %v83, 0.0
    %v86 = vadd.f32 %v61, 0.0
    %v87 = vmul.f32 %v83, %v61
    %v88 = vadd.f32 %v87, 0.0
    %s89 = scalar_lea.vmem [#allocation2], 8
    %v90 = vld [vmem:[%s89] sm:$0xff]
    %s91 = scalar_lea.vmem [#allocation5], 8
    %v92 = vld [vmem:[%s91] sm:$0xff]
    %v93 = vand.u32 2147483647, %v90
    %v94 = vsub.f32 0.0, %v93
    %v95 = vmul.f32 %v94, 1.442695
    %v96 = vpow.pop %v95
    %v97 = vmax.f32 %v90, 0.0
    %v98 = vmul.f32 %v90, %v92
    %v99 = vsub.f32 %v97, %v98
    %v100 = vadd.f32 %v96, 1.0
    %v101 = vlog2.pop %v100
    %v102 = vmul.f32 %v101, 0.6931472
    %v103 = vmul.f32 -0.5, %v96
    %v104 = vadd.f32 %v103, 1.0
    %v105 = vmul.f32 %v104, %v96
    %v106 = vand.u32 2147483647, %v96
    %vm107 = vcmp.lt.f32.partialorder %v106, 0.0004427343
    %v108 = vsel %vm107, %v105, %v102
    %v109 = vadd.f32 %v99, %v108
    %v110 = vadd.f32 %v96, 1.0
    %v111 = vrcp.pop %v110
    %vm112 = vcmp.ge.f32.partialorder %v90, 0.0
    %v113 = vmul.f32 %v96, %v111
    %v114 = vsel %vm112, %v111, %v113
    %v115 = vadd.f32 %v84, %v109
    %v116 = vadd.f32 %v85, %v114
    %v117 = vadd.f32 %v86, %v92
    %v118 = vmul.f32 %v114, %v92
    %v119 = vadd.f32 %v88, %v118
    %v120 = vld [vmem:[#allocation7] sm:$0xff]
    %v121 = vadd.f32 %v120, %v115
    %122 = vst [vmem:[#allocation7] sm:$0xff] %v121
    %s123 = scalar_lea.vmem [#allocation7], 8
    %v124 = vld [vmem:[%s123] sm:$0xff]
    %v125 = vadd.f32 %v124, %v116
    %126 = vst [vmem:[%s123] sm:$0xff] %v125
    %s127 = scalar_lea.vmem [#allocation7], 16
    %v128 = vld [vmem:[%s127] sm:$0xff]
    %v129 = vadd.f32 %v128, %v117
    %130 = vst [vmem:[%s127] sm:$0xff] %v129
    %s131 = scalar_lea.vmem [#allocation7], 24
    %v132 = vld [vmem:[%s131] sm:$0xff]
    %v133 = vadd.f32 %v132, %v119
    %134 = vst [vmem:[%s131] sm:$0xff] %v133
    // Predicated region
    $region22: #{tpu_custom_call.1} parent=1 // pred_check
      _
    $region23: #{tpu_custom_call.1} parent=1 // pred_check_branch
      %136 = sbr.rel (0) target = $region25
    $region24: #{tpu_custom_call.1} parent=1 // pred_region
      %s138 = ssub.s32 512, 512
      %139 = vsyncadd [#allocation4], %s138
      %s140 = sshll.u32 [#allocation7], 4
      %s141 = int_to_ptr.vmem [resolvable:$true] %s140
      %146 = dma.vmem_to_hbm [thread:$0]  %s141, 512, %s2, [#allocation4], 128, 128, 8
    $region25: #{tpu_custom_call.1} parent=1 // pred_fallthru
      _
    // Predicated region
    $region26: #{tpu_custom_call.1} parent=1 // pred_check
      _
    $region27: #{tpu_custom_call.1} parent=1 // pred_check_branch
      %148 = sbr.rel (0) target = $region29
    $region28: #{tpu_custom_call.1} parent=1 // pred_region
      %149 = dma.done [#allocation4], 512
    $region29: #{tpu_custom_call.1} parent=1 // pred_fallthru
      _
    %150 = vsyncpa [#allocation3], 1
    %151 = vsyncpa [#allocation6], 1
    %152 = vsyncpa [#allocation4], 1

</llo_original>
